<compile_context>
chip_gen: v7x
topology: tpu7x:2x2x1
jax: 0.10.0
libtpu: 0.0.40
codegen_flags: <defaults>
</compile_context>

<pallas_src>
import functools

import jax
import jax.numpy as jnp
import numpy as np
from jax.experimental import pallas as pl
from jax.experimental.pallas import tpu as pltpu

_EPS = 1e-5


# --------------------------------------------------------------------------
# Kernel
# --------------------------------------------------------------------------
def _make_kernel(TH, Wp, CP, fuse):
    def kernel(x_ref, w_ref, a_ref, bm_ref, bg_ref, beta_ref, o_ref):
        # x_ref block: (1, TH*Wp, CP); o_ref block: (1, TH, 2, Wp, CP)
        x2d = x_ref[0]                               # (TH*Wp, CP), no reshape
        xw = x2d.astype(w_ref.dtype)                 # bf16 cast only if C>=256

        a = a_ref[...]        # (CL, NG) group-mean reducer (pre-scaled by 1/G)
        bm = bm_ref[...]      # (NG, CL) group -> lane indicator
        bg = bg_ref[...]      # (NG, CL) indicator with LN gamma folded in
        beta = beta_ref[...]  # (1,  CL) tiled LN beta

        def layernorm(y):
            # Two-pass variance, all stats in f32 (numerically safe even with
            # bf16 expand-matmul operands). Reductions ride the MXU; rsqrt EUP.
            mean = jnp.dot(y, a, preferred_element_type=jnp.float32)
            mean_b = jnp.dot(mean, bm, preferred_element_type=jnp.float32)
            d = y - mean_b
            var = jnp.dot(d * d, a, preferred_element_type=jnp.float32)
            inv = jax.lax.rsqrt(var + _EPS)
            ig_b = jnp.dot(inv, bg, preferred_element_type=jnp.float32)
            return d * ig_b + beta

        if fuse:
            # One (R, CP) x (CP, 2CP) matmul; parity halves split at a
            # 128-lane-aligned boundary (free slice).
            y = jnp.dot(xw, w_ref[0], preferred_element_type=jnp.float32)
            z = layernorm(y).astype(o_ref.dtype)
            o_ref[0, :, 0, :, :] = z[:, :CP].reshape(TH, Wp, CP)
            o_ref[0, :, 1, :, :] = z[:, CP:].reshape(TH, Wp, CP)
        else:
            for p1 in range(2):   # static unroll over output row parity
                y = jnp.dot(xw, w_ref[p1], preferred_element_type=jnp.float32)
                z = layernorm(y).astype(o_ref.dtype)
                o_ref[0, :, p1, :, :] = z.reshape(TH, Wp, CP)

    return kernel


# --------------------------------------------------------------------------
# Tiling helpers
# --------------------------------------------------------------------------
def _vmem_caps():
    """(input-block byte cap, vmem_limit_bytes), generation aware."""
    try:
        phys = int(pltpu.get_tpu_info().vmem_capacity_bytes)
    except Exception:
        phys = 0
    mib = 1024 * 1024
    if phys and phys <= 64 * mib:          # v7x-class: 64 MiB physical VMEM
        return 3 * mib, 48 * mib
    if phys:                               # v5e / v6e: 128 MiB physical VMEM
        return 5 * mib, 80 * mib
    return 3 * mib, 32 * mib               # unknown backend: stay conservative


def _pick_pack(W, C):
    """Lane packing factor k: pack k adjacent W pixels into k*C lanes."""
    if C >= 128 or 128 % C != 0:
        return 1
    k = 128 // C
    while k > 1 and W % k != 0:
        k //= 2
    return k


def _pick_rows(H, Wp, row_bytes, cap_bytes):
    """Pick TH rows/block and (possibly padded) Hp so blocks are big,
    sublane-aligned (TH*Wp % 8 == 0 unless full), and tile Hp exactly."""
    ideal = max(1, cap_bytes // max(row_bytes, 1))
    if ideal >= H:
        return H, H
    best = 0
    for th in range(1, ideal + 1):
        if H % th == 0 and (th * Wp) % 8 == 0:
            best = th
    if best * 2 >= ideal:
        return best, H
    th = ideal
    while (th * Wp) % 8 != 0:              # grow a little for sublane alignment
        th += 1
    Hp = -(-H // th) * th                  # pad H up to a multiple of th
    return th, Hp


# --------------------------------------------------------------------------
# Wrapper
# --------------------------------------------------------------------------
def patch_expanding(x, we, gamma, beta, *, out_dtype=jnp.float32):
    """x: (B,H,W,C) f32; we: (C, 2C) (= torch expand.weight.T);
    gamma, beta: (C//2,). Returns (B, 2H, 2W, C//2) in out_dtype
    (out_dtype=jnp.bfloat16 halves HBM write bytes for downstream bf16 users)."""
    B, H, W, C = x.shape
    assert C % 2 == 0, "dim must be even (LayerNorm over dim // 2)"
    G = C // 2

    # Lane packing (small C) and parity-fusion decision.
    k = _pick_pack(W, C)
    Wp, CP = W // k, k * C
    fuse = (CP % 128) == 0

    # Generation-aware tile budget.
    in_cap, vmem_limit = _vmem_caps()
    TH, Hp = _pick_rows(H, Wp, Wp * CP * 4, in_cap)
    if Hp > H:
        x = jnp.pad(x, ((0, 0), (0, Hp - H), (0, 0), (0, 0)))

    # ---------------- offline parameter prep (precompute once in real use) ---
    mm_dtype = jnp.bfloat16 if C >= 256 else jnp.float32   # bf16 MXU for big C
    eye_k = jnp.eye(k, dtype=jnp.float32)
    w0 = jnp.kron(eye_k, we[:, :C])                         # (CP, CP) parity 0
    w1 = jnp.kron(eye_k, we[:, C:])                         # (CP, CP) parity 1
    if fuse:
        w_arr = jnp.concatenate([w0, w1], axis=1)[None].astype(mm_dtype)  # (1,CP,2CP)
        CL = 2 * CP
    else:
        w_arr = jnp.stack([w0, w1], axis=0).astype(mm_dtype)              # (2,CP,CP)
        CL = CP
    NG = CL // G
    ind = (jnp.arange(CL)[None, :] // G ==
           jnp.arange(NG)[:, None]).astype(jnp.float32)     # (NG, CL)
    a_mat = ind.T / G                                        # (CL, NG)
    bg = ind * jnp.tile(gamma, NG)[None, :]                  # (NG, CL)
    beta_t = jnp.tile(beta, NG)[None, :]                     # (1, CL)

    # Free row-major reshapes: (B,Hp,W,C) -> (B,Hp,Wp,CP) -> (B,Hp*Wp,CP).
    x_rows = x.reshape(B, Hp * Wp, CP)

    grid = (B, Hp // TH)
    out_itemsize = np.dtype(out_dtype).itemsize
    cost = pl.CostEstimate(
        flops=4 * B * Hp * W * C * C + 16 * B * Hp * W * C,
        transcendentals=4 * B * Hp * W,
        bytes_accessed=(B * Hp * W * C * 4
                        + B * Hp * 2 * Wp * CP * out_itemsize
                        + int(w_arr.size) * w_arr.dtype.itemsize))

    out5 = pl.pallas_call(
        _make_kernel(TH, Wp, CP, fuse),
        out_shape=jax.ShapeDtypeStruct((B, Hp, 2, Wp, CP), out_dtype),
        grid=grid,
        in_specs=[
            pl.BlockSpec((1, TH * Wp, CP), lambda b, t: (b, t, 0)),
            pl.BlockSpec(w_arr.shape, lambda b, t: (0, 0, 0)),
            pl.BlockSpec(a_mat.shape, lambda b, t: (0, 0)),
            pl.BlockSpec(ind.shape, lambda b, t: (0, 0)),
            pl.BlockSpec(bg.shape, lambda b, t: (0, 0)),
            pl.BlockSpec(beta_t.shape, lambda b, t: (0, 0)),
        ],
        out_specs=pl.BlockSpec((1, TH, 2, Wp, CP),
                               lambda b, t: (b, t, 0, 0, 0)),
        compiler_params=pltpu.CompilerParams(
            dimension_semantics=("parallel", "parallel"),
            vmem_limit_bytes=vmem_limit),
        cost_estimate=cost,
    )(x_rows, w_arr, a_mat, ind, bg, beta_t)

    # Free pixel shuffle: (B, Hp, 2, Wp, k*2*G) -> (B, 2Hp, 2W, G).
    out = out5.reshape(B, 2 * Hp, 2 * W, G)
    if Hp > H:
        out = out[:, :2 * H]
    return out


# ---------------- pure-JAX reference (for correctness check) ----------------
def _reference(x, we, gamma, beta):
    B, H, W, C = x.shape
    G = C // 2
    y = jnp.einsum('bhwc,cd->bhwd', x, we)                  # (B, H, W, 2C)
    y = y.reshape(B, H, W, 2, 2, G)
    y = jnp.transpose(y, (0, 1, 3, 2, 4, 5)).reshape(B, 2 * H, 2 * W, G)
    mean = jnp.mean(y, axis=-1, keepdims=True)
    var = jnp.mean(jnp.square(y - mean), axis=-1, keepdims=True)
    return (y - mean) * jax.lax.rsqrt(var + _EPS) * gamma + beta


if __name__ == "__main__":
    key = jax.random.PRNGKey(0)
    k1, k2, k3, k4 = jax.random.split(key, 4)

    B, H, W, dim = 2, 16, 16, 32
    x = jax.random.normal(k1, (B, H, W, dim), jnp.float32)
    we = jax.random.normal(k2, (dim, 2 * dim), jnp.float32) * 0.3
    gamma = jax.random.uniform(k3, (dim // 2,), jnp.float32, 0.5, 1.5)
    beta = jax.random.normal(k4, (dim // 2,), jnp.float32) * 0.1

    out = jax.block_until_ready(patch_expanding(x, we, gamma, beta))
    ref = jax.block_until_ready(_reference(x, we, gamma, beta))

    assert out.shape == (B, 2 * H, 2 * W, dim // 2), out.shape
    np.testing.assert_allclose(np.asarray(out), np.asarray(ref),
                               rtol=5e-4, atol=5e-4)
    print("KERNEL_OK")
</pallas_src>

<mosaic_0001>
module attributes {stable_mosaic.version = 11 : i64} {
  func.func @kernel(%arg0: i32, %arg1: i32, %arg2: memref<1x64x128xf32, #tpu.memory_space<vmem>>, %arg3: memref<1x128x256xf32, #tpu.memory_space<vmem>>, %arg4: memref<256x16xf32, #tpu.memory_space<vmem>>, %arg5: memref<16x256xf32, #tpu.memory_space<vmem>>, %arg6: memref<16x256xf32, #tpu.memory_space<vmem>>, %arg7: memref<1x256xf32, #tpu.memory_space<vmem>>, %arg8: memref<1x16x2x4x128xf32, #tpu.memory_space<vmem>>) attributes {dimension_semantics = [#tpu.dimension_semantics<parallel>, #tpu.dimension_semantics<parallel>], iteration_bounds = array<i64: 2, 1>, scalar_prefetch = 0 : i64, scratch_operands = 0 : i64, tpu.core_type = #tpu.core_type<tc>, window_params = [{transform_indices = @transform_0, window_bounds = array<i64: 1, 64, 128>}, {pipeline_mode = #tpu.pipeline_mode<synchronous>, transform_indices = @transform_1, window_bounds = array<i64: 1, 128, 256>}, {pipeline_mode = #tpu.pipeline_mode<synchronous>, transform_indices = @transform_2, window_bounds = array<i64: 256, 16>}, {pipeline_mode = #tpu.pipeline_mode<synchronous>, transform_indices = @transform_3, window_bounds = array<i64: 16, 256>}, {pipeline_mode = #tpu.pipeline_mode<synchronous>, transform_indices = @transform_4, window_bounds = array<i64: 16, 256>}, {pipeline_mode = #tpu.pipeline_mode<synchronous>, transform_indices = @transform_5, window_bounds = array<i64: 1, 256>}, {transform_indices = @transform_6, window_bounds = array<i64: 1, 16, 2, 4, 128>}]} {
    %c0 = arith.constant 0 : index
    %c0_0 = arith.constant 0 : index
    %c0_1 = arith.constant 0 : index
    %0 = vector.load %arg2[%c0, %c0_0, %c0_1] : memref<1x64x128xf32, #tpu.memory_space<vmem>>, vector<1x64x128xf32>
    %1 = vector.shape_cast %0 : vector<1x64x128xf32> to vector<64x128xf32>
    %c0_2 = arith.constant 0 : index
    %c0_3 = arith.constant 0 : index
    %2 = vector.load %arg4[%c0_2, %c0_3] : memref<256x16xf32, #tpu.memory_space<vmem>>, vector<256x16xf32>
    %c0_4 = arith.constant 0 : index
    %c0_5 = arith.constant 0 : index
    %3 = vector.load %arg5[%c0_4, %c0_5] : memref<16x256xf32, #tpu.memory_space<vmem>>, vector<16x256xf32>
    %c0_6 = arith.constant 0 : index
    %c0_7 = arith.constant 0 : index
    %4 = vector.load %arg6[%c0_6, %c0_7] : memref<16x256xf32, #tpu.memory_space<vmem>>, vector<16x256xf32>
    %c0_8 = arith.constant 0 : index
    %c0_9 = arith.constant 0 : index
    %5 = vector.load %arg7[%c0_8, %c0_9] : memref<1x256xf32, #tpu.memory_space<vmem>>, vector<1x256xf32>
    %c0_10 = arith.constant 0 : index
    %c0_11 = arith.constant 0 : index
    %c0_12 = arith.constant 0 : index
    %6 = vector.load %arg3[%c0_10, %c0_11, %c0_12] : memref<1x128x256xf32, #tpu.memory_space<vmem>>, vector<1x128x256xf32>
    %7 = vector.shape_cast %6 : vector<1x128x256xf32> to vector<128x256xf32>
    %cst = arith.constant dense<0.000000e+00> : vector<64x256xf32>
    %8 = tpu.matmul %1, %7, %cst {dimension_numbers = #tpu.dot_dimension_numbers<[1], [0], [0], [1], [0, 0, 1, 1], [], []>} : vector<64x128xf32>, vector<128x256xf32>, vector<64x256xf32> -> vector<64x256xf32>
    %cst_13 = arith.constant dense<0.000000e+00> : vector<64x16xf32>
    %9 = tpu.matmul %8, %2, %cst_13 {dimension_numbers = #tpu.dot_dimension_numbers<[1], [0], [0], [1], [0, 0, 1, 1], [], []>} : vector<64x256xf32>, vector<256x16xf32>, vector<64x16xf32> -> vector<64x16xf32>
    %cst_14 = arith.constant dense<0.000000e+00> : vector<64x256xf32>
    %10 = tpu.matmul %9, %3, %cst_14 {dimension_numbers = #tpu.dot_dimension_numbers<[1], [0], [0], [1], [0, 0, 1, 1], [], []>} : vector<64x16xf32>, vector<16x256xf32>, vector<64x256xf32> -> vector<64x256xf32>
    %11 = arith.subf %8, %10 : vector<64x256xf32>
    %12 = arith.mulf %11, %11 : vector<64x256xf32>
    %cst_15 = arith.constant dense<0.000000e+00> : vector<64x16xf32>
    %13 = tpu.matmul %12, %2, %cst_15 {dimension_numbers = #tpu.dot_dimension_numbers<[1], [0], [0], [1], [0, 0, 1, 1], [], []>} : vector<64x256xf32>, vector<256x16xf32>, vector<64x16xf32> -> vector<64x16xf32>
    %cst_16 = arith.constant 9.99999974E-6 : f32
    %14 = vector.broadcast %cst_16 : f32 to vector<64x16xf32>
    %15 = arith.addf %13, %14 : vector<64x16xf32>
    %16 = math.rsqrt %15 : vector<64x16xf32>
    %cst_17 = arith.constant dense<0.000000e+00> : vector<64x256xf32>
    %17 = tpu.matmul %16, %4, %cst_17 {dimension_numbers = #tpu.dot_dimension_numbers<[1], [0], [0], [1], [0, 0, 1, 1], [], []>} : vector<64x16xf32>, vector<16x256xf32>, vector<64x256xf32> -> vector<64x256xf32>
    %18 = arith.mulf %11, %17 : vector<64x256xf32>
    %19 = vector.broadcast %5 : vector<1x256xf32> to vector<64x256xf32>
    %20 = arith.addf %18, %19 : vector<64x256xf32>
    %21 = vector.extract_strided_slice %20 {offsets = [0, 0], sizes = [64, 128], strides = [1, 1]} : vector<64x256xf32> to vector<64x128xf32>
    %22 = vector.shape_cast %21 : vector<64x128xf32> to vector<16x4x128xf32>
    %c0_18 = arith.constant 0 : index
    %c0_19 = arith.constant 0 : index
    %c0_20 = arith.constant 0 : index
    %c0_21 = arith.constant 0 : index
    %c0_22 = arith.constant 0 : index
    %23 = vector.load %arg8[%c0_18, %c0_19, %c0_20, %c0_21, %c0_22] : memref<1x16x2x4x128xf32, #tpu.memory_space<vmem>>, vector<1x16x1x4x128xf32>
    %24 = vector.shape_cast %23 : vector<1x16x1x4x128xf32> to vector<16x4x128xf32>
    %25 = vector.shape_cast %22 : vector<16x4x128xf32> to vector<1x16x1x4x128xf32>
    tpu.vector_store %arg8[%c0_18, %c0_19, %c0_20, %c0_21, %c0_22], %25 {strides = array<i32>} : memref<1x16x2x4x128xf32, #tpu.memory_space<vmem>>, vector<1x16x1x4x128xf32>,
    %26 = vector.extract_strided_slice %20 {offsets = [0, 128], sizes = [64, 128], strides = [1, 1]} : vector<64x256xf32> to vector<64x128xf32>
    %27 = vector.shape_cast %26 : vector<64x128xf32> to vector<16x4x128xf32>
    %c0_23 = arith.constant 0 : index
    %c0_24 = arith.constant 0 : index
    %c1 = arith.constant 1 : index
    %c0_25 = arith.constant 0 : index
    %c0_26 = arith.constant 0 : index
    %28 = vector.load %arg8[%c0_23, %c0_24, %c1, %c0_25, %c0_26] : memref<1x16x2x4x128xf32, #tpu.memory_space<vmem>>, vector<1x16x1x4x128xf32>
    %29 = vector.shape_cast %28 : vector<1x16x1x4x128xf32> to vector<16x4x128xf32>
    %30 = vector.shape_cast %27 : vector<16x4x128xf32> to vector<1x16x1x4x128xf32>
    tpu.vector_store %arg8[%c0_23, %c0_24, %c1, %c0_25, %c0_26], %30 {strides = array<i32>} : memref<1x16x2x4x128xf32, #tpu.memory_space<vmem>>, vector<1x16x1x4x128xf32>,
    return
  }
  func.func @transform_0(%arg0: i32, %arg1: i32) -> (i32, i32, i32) {
    %c0_i32 = arith.constant 0 : i32
    %c0_i32_0 = arith.constant 0 : i32
    return %arg0, %arg1, %c0_i32 : i32, i32, i32
  }
  func.func @transform_1(%arg0: i32, %arg1: i32) -> (i32, i32, i32) {
    %c0_i32 = arith.constant 0 : i32
    %c0_i32_0 = arith.constant 0 : i32
    %c0_i32_1 = arith.constant 0 : i32
    %c0_i32_2 = arith.constant 0 : i32
    return %c0_i32, %c0_i32_0, %c0_i32_1 : i32, i32, i32
  }
  func.func @transform_2(%arg0: i32, %arg1: i32) -> (i32, i32) {
    %c0_i32 = arith.constant 0 : i32
    %c0_i32_0 = arith.constant 0 : i32
    %c0_i32_1 = arith.constant 0 : i32
    return %c0_i32, %c0_i32_0 : i32, i32
  }
  func.func @transform_3(%arg0: i32, %arg1: i32) -> (i32, i32) {
    %c0_i32 = arith.constant 0 : i32
    %c0_i32_0 = arith.constant 0 : i32
    %c0_i32_1 = arith.constant 0 : i32
    return %c0_i32, %c0_i32_0 : i32, i32
  }
  func.func @transform_4(%arg0: i32, %arg1: i32) -> (i32, i32) {
    %c0_i32 = arith.constant 0 : i32
    %c0_i32_0 = arith.constant 0 : i32
    %c0_i32_1 = arith.constant 0 : i32
    return %c0_i32, %c0_i32_0 : i32, i32
  }
  func.func @transform_5(%arg0: i32, %arg1: i32) -> (i32, i32) {
    %c0_i32 = arith.constant 0 : i32
    %c0_i32_0 = arith.constant 0 : i32
    %c0_i32_1 = arith.constant 0 : i32
    return %c0_i32, %c0_i32_0 : i32, i32
  }
  func.func @transform_6(%arg0: i32, %arg1: i32) -> (i32, i32, i32, i32, i32) {
    %c0_i32 = arith.constant 0 : i32
    %c0_i32_0 = arith.constant 0 : i32
    %c0_i32_1 = arith.constant 0 : i32
    %c0_i32_2 = arith.constant 0 : i32
    return %arg0, %arg1, %c0_i32, %c0_i32_0, %c0_i32_1 : i32, i32, i32, i32, i32
  }
}

</mosaic_0001>

<llo_original>
// kernel: tpu_custom_call.1
$region0: #{tpu_custom_call.1}
  #allocation0 [shape = 'u32[]', space=smem, size = 0x4, offset = 0x4, fixed_abs, tag = 'smem constant byte address 0x4 - core index']
  #allocation1 [shape = 'u32[144,128]{1,0:T(1,128)}', space=vmem, size = 0x12000, scoped, tag = 'internal scratch']
  %s0 = inlined_call_operand.hbm [shape: f32[2,64,128], index: 0, kind: input, shape index: {}]
  %s1 = inlined_call_operand.vmem [shape: f32[1,128,256], index: 1, kind: input, shape index: {}]
  %s2 = inlined_call_operand.vmem [shape: f32[256,16], index: 2, kind: input, shape index: {}]
  %s3 = inlined_call_operand.vmem [shape: f32[16,256], index: 3, kind: input, shape index: {}]
  %s4 = inlined_call_operand.hbm [shape: f32[16,256], index: 4, kind: input, shape index: {}]
  %s5 = inlined_call_operand.vmem [shape: f32[1,256], index: 5, kind: input, shape index: {}]
  %s6 = inlined_call_operand.hbm [shape: f32[2,16,2,4,128], index: 6, kind: output, shape index: {}]
  %s7 = sld [smem:[#allocation0]]
  $region65: #{tpu_custom_call.1} parent=0
    _
  %s9 = ssub.s32 1, %s7
  %s10 = scalar_select 0, %s9, %s7
  $region1: #{tpu_custom_call.1} parent=0
    #allocation2 [shape = 'u8[65536]{0}', space=vmem, size = 0x10000, scoped, tag = 'input window, operand 0']
    #allocation3 [shape = 's32[2]{0}', space=sflag, size = 0x8, scoped, tag = 'scoped memory for tpu_custom_call.1']
    #allocation4 [shape = 's32[2]{0}', space=sflag, size = 0x8, scoped, tag = 'scoped memory for tpu_custom_call.1']
    #allocation5 [shape = 'u8[16384]{0}', space=vmem, size = 0x4000, scoped, tag = 'input window, operand 4, single buffered']
    #allocation6 [shape = 's32[1]{0}', space=sflag, size = 0x4, scoped, tag = 'scoped memory for tpu_custom_call.1']
    #allocation7 [shape = 'u8[131072]{0}', space=vmem, size = 0x20000, scoped, tag = 'output window, operand 0']
    %11 = vsyncpa [#allocation3], 0
    %s12 = scalar_lea.sflag [#allocation3], 1
    %13 = vsyncpa %s12, 0
    %14 = vsyncpa [#allocation6], 0
    %15 = vsyncpa [#allocation4], 0
    %s16 = scalar_lea.sflag [#allocation4], 1
    %17 = vsyncpa %s16, 0
    loop: start=0, step=1, limit=4
    $region2: #{tpu_custom_call.1} parent=1 // loop_pre_header
      _
    $region3: #{tpu_custom_call.1} parent=1 // loop_header
      %s19 = sphi 0, %s23
      %p20 = scmp.ge.s32.totalorder %s19, 4
      %s26 = sphi 0, %s38
      %s27 = sphi 0, %s34
      %s28 = sphi 0, %s26
      %s29 = sphi 0, %s27
      %s30 = sphi 0, %s28
      %s31 = sphi 0, %s29
      %s43 = sphi 0, %s45
      %s46 = sphi 0, %s43
      %s47 = sphi 0, %s46
      %s63 = sphi 0, %s47
      %s67 = sphi 0, %s67
      %s69 = sphi 0, %s67
      %s70 = sphi 0, %s69
      %s84 = sphi 0, %s70
      %s88 = sphi 0, %s88
      %s90 = sphi 0, %s88
      %s91 = sphi 0, %s90
      %s105 = sphi 0, %s91
      %s109 = sphi 0, %s109
      %s111 = sphi 0, %s109
      %s112 = sphi 0, %s111
      %s126 = sphi 0, %s112
      %s130 = sphi 0, %s130
      %s132 = sphi 0, %s130
      %s133 = sphi 0, %s132
      %s147 = sphi 0, %s133
      %s151 = sphi 0, %s151
      %s153 = sphi 0, %s151
      %s154 = sphi 0, %s153
      %s168 = sphi 0, %s154
      %s176 = sphi 0, %s178
      %s179 = sphi 0, %s176
      %s180 = sphi 0, %s179
      %s196 = sphi 0, %s180
    $region4: #{tpu_custom_call.1} parent=1 // loop_header_branch
      %22 = sbr.rel (%p20) target = $region8
    $region5: #{tpu_custom_call.1} parent=1 // loop_body
      %s24 = ssub.s32 %s19, 1
      %s25 = ssub.s32 %s19, 2
      %s32 = sadd.s32 1, %s27
      %p33 = scmp.ge.s32.totalorder %s32, 1
      %s34 = scalar_select %p33, 0, %s32
      %s35 = sadd.s32 1, %s26
      %s36 = scalar_select %p33, %s35, %s26
      %p37 = scmp.ge.s32.totalorder %s36, 2
      %s38 = scalar_select %p37, 0, %s36
      %s39 = ssub.s32 %s26, %s38
      %s40 = ssub.s32 %s27, %s34
      %s41 = sor.u32 %s39, %s40
      %p42 = scmp.eq.s32.totalorder %s41, 0
      %s44 = sadd.s32 %s43, 1
      %s45 = scalar_select %p42, %s43, %s44
      %p48 = pneg %p42
      %p49 = scmp.eq.s32.totalorder %s19, 1
      %p50 = por %p48, %p49
      %p51 = scmp.ne.s32.totalorder %s43, %s46
      %p52 = scmp.eq.s32.totalorder %s19, 0
      %p53 = por %p51, %p52
      %p54 = scmp.ne.s32.totalorder %s43, %s46
      %p55 = scmp.eq.s32.totalorder %s24, 1
      %p56 = por %p54, %p55
      %p57 = scmp.ne.s32.totalorder %s46, %s47
      %p58 = scmp.eq.s32.totalorder %s24, 0
      %p59 = por %p57, %p58
      %p60 = scmp.ne.s32.totalorder %s46, %s47
      %p61 = scmp.eq.s32.totalorder %s25, 1
      %p62 = por %p60, %p61
      %p64 = scmp.ne.s32.totalorder %s47, %s63
      %p65 = scmp.eq.s32.totalorder %s25, 0
      %p66 = por %p64, %p65
      %s68 = sadd.s32 %s67, 1
      %p71 = scmp.eq.s32.totalorder %s19, 1
      %p72 = scmp.ne.s32.totalorder %s67, %s69
      %p73 = scmp.eq.s32.totalorder %s19, 0
      %p74 = por %p72, %p73
      %p75 = scmp.ne.s32.totalorder %s67, %s69
      %p76 = scmp.eq.s32.totalorder %s24, 1
      %p77 = por %p75, %p76
      %p78 = scmp.ne.s32.totalorder %s69, %s70
      %p79 = scmp.eq.s32.totalorder %s24, 0
      %p80 = por %p78, %p79
      %p81 = scmp.ne.s32.totalorder %s69, %s70
      %p82 = scmp.eq.s32.totalorder %s25, 1
      %p83 = por %p81, %p82
      %p85 = scmp.ne.s32.totalorder %s70, %s84
      %p86 = scmp.eq.s32.totalorder %s25, 0
      %p87 = por %p85, %p86
      %s89 = sadd.s32 %s88, 1
      %p92 = scmp.eq.s32.totalorder %s19, 1
      %p93 = scmp.ne.s32.totalorder %s88, %s90
      %p94 = scmp.eq.s32.totalorder %s19, 0
      %p95 = por %p93, %p94
      %p96 = scmp.ne.s32.totalorder %s88, %s90
      %p97 = scmp.eq.s32.totalorder %s24, 1
      %p98 = por %p96, %p97
      %p99 = scmp.ne.s32.totalorder %s90, %s91
      %p100 = scmp.eq.s32.totalorder %s24, 0
      %p101 = por %p99, %p100
      %p102 = scmp.ne.s32.totalorder %s90, %s91
      %p103 = scmp.eq.s32.totalorder %s25, 1
      %p104 = por %p102, %p103
      %p106 = scmp.ne.s32.totalorder %s91, %s105
      %p107 = scmp.eq.s32.totalorder %s25, 0
      %p108 = por %p106, %p107
      %s110 = sadd.s32 %s109, 1
      %p113 = scmp.eq.s32.totalorder %s19, 1
      %p114 = scmp.ne.s32.totalorder %s109, %s111
      %p115 = scmp.eq.s32.totalorder %s19, 0
      %p116 = por %p114, %p115
      %p117 = scmp.ne.s32.totalorder %s109, %s111
      %p118 = scmp.eq.s32.totalorder %s24, 1
      %p119 = por %p117, %p118
      %p120 = scmp.ne.s32.totalorder %s111, %s112
      %p121 = scmp.eq.s32.totalorder %s24, 0
      %p122 = por %p120, %p121
      %p123 = scmp.ne.s32.totalorder %s111, %s112
      %p124 = scmp.eq.s32.totalorder %s25, 1
      %p125 = por %p123, %p124
      %p127 = scmp.ne.s32.totalorder %s112, %s126
      %p128 = scmp.eq.s32.totalorder %s25, 0
      %p129 = por %p127, %p128
      %s131 = sadd.s32 %s130, 1
      %p134 = scmp.eq.s32.totalorder %s19, 1
      %p135 = scmp.ne.s32.totalorder %s130, %s132
      %p136 = scmp.eq.s32.totalorder %s19, 0
      %p137 = por %p135, %p136
      %p138 = scmp.ne.s32.totalorder %s130, %s132
      %p139 = scmp.eq.s32.totalorder %s24, 1
      %p140 = por %p138, %p139
      %p141 = scmp.ne.s32.totalorder %s132, %s133
      %p142 = scmp.eq.s32.totalorder %s24, 0
      %p143 = por %p141, %p142
      %p144 = scmp.ne.s32.totalorder %s132, %s133
      %p145 = scmp.eq.s32.totalorder %s25, 1
      %p146 = por %p144, %p145
      %p148 = scmp.ne.s32.totalorder %s133, %s147
      %p149 = scmp.eq.s32.totalorder %s25, 0
      %p150 = por %p148, %p149
      %s152 = sadd.s32 %s151, 1
      %p155 = scmp.eq.s32.totalorder %s19, 1
      %p156 = scmp.ne.s32.totalorder %s151, %s153
      %p157 = scmp.eq.s32.totalorder %s19, 0
      %p158 = por %p156, %p157
      %p159 = scmp.ne.s32.totalorder %s151, %s153
      %p160 = scmp.eq.s32.totalorder %s24, 1
      %p161 = por %p159, %p160
      %p162 = scmp.ne.s32.totalorder %s153, %s154
      %p163 = scmp.eq.s32.totalorder %s24, 0
      %p164 = por %p162, %p163
      %p165 = scmp.ne.s32.totalorder %s153, %s154
      %p166 = scmp.eq.s32.totalorder %s25, 1
      %p167 = por %p165, %p166
      %p169 = scmp.ne.s32.totalorder %s154, %s168
      %p170 = scmp.eq.s32.totalorder %s25, 0
      %p171 = por %p169, %p170
      %s172 = ssub.s32 %s26, %s38
      %s173 = ssub.s32 %s27, %s34
      %s174 = sor.u32 %s172, %s173
      %p175 = scmp.eq.s32.totalorder %s174, 0
      %s177 = sadd.s32 %s176, 1
      %s178 = scalar_select %p175, %s176, %s177
      %p181 = pneg %p175
      %p182 = scmp.eq.s32.totalorder %s19, 1
      %p183 = por %p181, %p182
      %p184 = scmp.ne.s32.totalorder %s176, %s179
      %p185 = scmp.eq.s32.totalorder %s19, 0
      %p186 = por %p184, %p185
      %p187 = scmp.ne.s32.totalorder %s176, %s179
      %p188 = scmp.eq.s32.totalorder %s24, 1
      %p189 = por %p187, %p188
      %p190 = scmp.ne.s32.totalorder %s179, %s180
      %p191 = scmp.eq.s32.totalorder %s24, 0
      %p192 = por %p190, %p191
      %p193 = scmp.ne.s32.totalorder %s179, %s180
      %p194 = scmp.eq.s32.totalorder %s25, 1
      %p195 = por %p193, %p194
      %p197 = scmp.ne.s32.totalorder %s180, %s196
      %p198 = scmp.eq.s32.totalorder %s25, 0
      %p199 = por %p197, %p198
      %p200 = scmp.le.s32.totalorder 1, %s19
      %p201 = scmp.lt.s32.totalorder %s19, 3
      %p202 = pnand %p200, %p201
      %p203 = pneg %p202
      // Predicated region
      $region9: #{tpu_custom_call.1} parent=5 // pred_check
        _
      $region10: #{tpu_custom_call.1} parent=5 // pred_check_branch
        %205 = sbr.rel (%p202) target = $region12
      $region11: #{tpu_custom_call.1} parent=5 // pred_region
        %s206 = ssub.s32 %s19, 1
        // Predicated region
        $region13: #{tpu_custom_call.1} parent=11 // pred_check
          %p207 = pneg %p80
        $region14: #{tpu_custom_call.1} parent=11 // pred_check_branch
          %209 = sbr.rel (%p207) target = $region16
        $region15: #{tpu_custom_call.1} parent=11 // pred_region
          _
        $region16: #{tpu_custom_call.1} parent=11 // pred_fallthru
          _
        // Predicated region
        $region17: #{tpu_custom_call.1} parent=11 // pred_check
          %p210 = pneg %p101
        $region18: #{tpu_custom_call.1} parent=11 // pred_check_branch
          %212 = sbr.rel (%p210) target = $region20
        $region19: #{tpu_custom_call.1} parent=11 // pred_region
          _
        $region20: #{tpu_custom_call.1} parent=11 // pred_fallthru
          _
        // Predicated region
        $region21: #{tpu_custom_call.1} parent=11 // pred_check
          %p213 = pneg %p122
        $region22: #{tpu_custom_call.1} parent=11 // pred_check_branch
          %215 = sbr.rel (%p213) target = $region24
        $region23: #{tpu_custom_call.1} parent=11 // pred_region
          _
        $region24: #{tpu_custom_call.1} parent=11 // pred_fallthru
          _
        // Predicated region
        $region25: #{tpu_custom_call.1} parent=11 // pred_check
          %p216 = pneg %p143
        $region26: #{tpu_custom_call.1} parent=11 // pred_check_branch
          %218 = sbr.rel (%p216) target = $region28
        $region27: #{tpu_custom_call.1} parent=11 // pred_region
          %s220 = ssub.s32 512, 512
          %221 = vsyncadd [#allocation6], %s220
          %s222 = sshll.u32 [#allocation5], 4
          %s223 = int_to_ptr.vmem [resolvable:$true] %s222
          %228 = dma.hbm_to_vmem [thread:$0]  %s4, 512, %s223, [#allocation6], 256, 256, 16
        $region28: #{tpu_custom_call.1} parent=11 // pred_fallthru
          _
        // Predicated region
        $region29: #{tpu_custom_call.1} parent=11 // pred_check
          %p229 = pneg %p164
        $region30: #{tpu_custom_call.1} parent=11 // pred_check_branch
          %231 = sbr.rel (%p229) target = $region32
        $region31: #{tpu_custom_call.1} parent=11 // pred_region
          _
        $region32: #{tpu_custom_call.1} parent=11 // pred_fallthru
          _
      $region12: #{tpu_custom_call.1} parent=5 // pred_fallthru
        _
      %p232 = scmp.lt.s32.totalorder %s19, 2
      // Predicated region
      $region33: #{tpu_custom_call.1} parent=5 // pred_check
        %p233 = pneg %p232
      $region34: #{tpu_custom_call.1} parent=5 // pred_check_branch
        %235 = sbr.rel (%p233) target = $region36
      $region35: #{tpu_custom_call.1} parent=5 // pred_region
        // Predicated region
        $region37: #{tpu_custom_call.1} parent=35 // pred_check
          %p236 = pneg %p53
        $region38: #{tpu_custom_call.1} parent=35 // pred_check_branch
          %238 = sbr.rel (%p236) target = $region40
        $region39: #{tpu_custom_call.1} parent=35 // pred_region
          %s239 = sand.u32 %s43, 1
          %s240 = scalar_lea.sflag [#allocation3], %s239
          %s241 = sand.u32 %s43, 1
          %s242 = smul.addr %s241, 64
          %s243 = scalar_lea.vmem [#allocation2], %s242
          %s244 = smul.u32 8, %s27
          %s246 = ssub.s32 1024, 1024
          %247 = vsyncadd %s240, %s246
          %s248 = smul.addr %s26, 8
          %s249 = sadd.s32 %s244, %s248
          %s250 = smul.addr %s249, 128
          %s251 = scalar_lea.hbm %s0, %s250
          %s252 = sshll.u32 %s243, 4
          %s253 = int_to_ptr.vmem [resolvable:$true] %s252
          %258 = dma.hbm_to_vmem [thread:$0]  %s251, 1024, %s253, %s240, 128, 128, 8
        $region40: #{tpu_custom_call.1} parent=35 // pred_fallthru
          _
      $region36: #{tpu_custom_call.1} parent=5 // pred_fallthru
        _
      %p259 = scmp.le.s32.totalorder 1, %s19
      %p260 = scmp.lt.s32.totalorder %s19, 3
      %p261 = pnand %p259, %p260
      %p262 = pneg %p261
      // Predicated region
      $region41: #{tpu_custom_call.1} parent=5 // pred_check
        _
      $region42: #{tpu_custom_call.1} parent=5 // pred_check_branch
        %264 = sbr.rel (%p261) target = $region44
      $region43: #{tpu_custom_call.1} parent=5 // pred_region
        %s265 = ssub.s32 %s19, 1
        %s266 = sand.u32 %s46, 1
        %s267 = scalar_lea.sflag [#allocation3], %s266
        %s268 = sand.u32 %s46, 1
        %s269 = smul.addr %s268, 64
        %s270 = scalar_lea.vmem [#allocation2], %s269
        // Predicated region
        $region45: #{tpu_custom_call.1} parent=43 // pred_check
          %p271 = pneg %p59
        $region46: #{tpu_custom_call.1} parent=43 // pred_check_branch
          %273 = sbr.rel (%p271) target = $region48
        $region47: #{tpu_custom_call.1} parent=43 // pred_region
          %274 = dma.done %s267, 1024
        $region48: #{tpu_custom_call.1} parent=43 // pred_fallthru
          _
        // Predicated region
        $region49: #{tpu_custom_call.1} parent=43 // pred_check
          %p275 = pneg %p143
        $region50: #{tpu_custom_call.1} parent=43 // pred_check_branch
          %277 = sbr.rel (%p275) target = $region52
        $region51: #{tpu_custom_call.1} parent=43 // pred_region
          %278 = dma.done [#allocation6], 512
        $region52: #{tpu_custom_call.1} parent=43 // pred_fallthru
          _
        %s279 = sand.u32 %s46, 1
        %s280 = scalar_lea.sflag [#allocation3], %s279
        %s281 = sand.u32 %s46, 1
        %s282 = smul.addr %s281, 64
        %s283 = scalar_lea.vmem [#allocation2], %s282
        %p284 = pneg %p59
        %p285 = pneg %p56
        %p286 = pneg %p80
        %p287 = pneg %p77
        %p288 = pneg %p101
        %p289 = pneg %p98
        %p290 = pneg %p122
        %p291 = pneg %p119
        %p292 = pneg %p143
        %p293 = pneg %p140
        %p294 = pneg %p164
        %p295 = pneg %p161
        %p296 = pneg %p192
        %p297 = pneg %p189
        %s298 = sand.u32 %s179, 1
        %s299 = scalar_lea.sflag [#allocation4], %s298
        %s300 = sand.u32 %s179, 1
        %s301 = smul.addr %s300, 128
        %s302 = scalar_lea.vmem [#allocation7], %s301
        %s303 = smul.u32 8, %s29
        %s304 = smul.u32 16, %s29
        %v305 = vld [vmem:[%s270] sm:$0xff]
        %v306 = vld [vmem:[%s270 + $0x8] sm:$0xff]
        %v307 = vld [vmem:[%s270 + $0x10] sm:$0xff]
        %v308 = vld [vmem:[%s270 + $0x18] sm:$0xff]
        %v309 = vld [vmem:[%s270 + $0x20] sm:$0xff]
        %v310 = vld [vmem:[%s270 + $0x28] sm:$0xff]
        %v311 = vld [vmem:[%s270 + $0x30] sm:$0xff]
        %v312 = vld [vmem:[%s270 + $0x38] sm:$0xff]
        %v313 = vld [vmem:[%s2] sm:$0xff]
        %v314 = vld [vmem:[%s2 + $0x8] sm:$0xff]
        %v315 = vld [vmem:[%s2 + $0x10] sm:$0xff]
        %v316 = vld [vmem:[%s2 + $0x18] sm:$0xff]
        %v317 = vld [vmem:[%s2 + $0x20] sm:$0xff]
        %v318 = vld [vmem:[%s2 + $0x28] sm:$0xff]
        %v319 = vld [vmem:[%s2 + $0x30] sm:$0xff]
        %v320 = vld [vmem:[%s2 + $0x38] sm:$0xff]
        %v321 = vld [vmem:[%s2 + $0x40] sm:$0xff]
        %v322 = vld [vmem:[%s2 + $0x48] sm:$0xff]
        %v323 = vld [vmem:[%s2 + $0x50] sm:$0xff]
        %v324 = vld [vmem:[%s2 + $0x58] sm:$0xff]
        %v325 = vld [vmem:[%s2 + $0x60] sm:$0xff]
        %v326 = vld [vmem:[%s2 + $0x68] sm:$0xff]
        %v327 = vld [vmem:[%s2 + $0x70] sm:$0xff]
        %v328 = vld [vmem:[%s2 + $0x78] sm:$0xff]
        %v329 = vld [vmem:[%s2 + $0x80] sm:$0xff]
        %v330 = vld [vmem:[%s2 + $0x88] sm:$0xff]
        %v331 = vld [vmem:[%s2 + $0x90] sm:$0xff]
        %v332 = vld [vmem:[%s2 + $0x98] sm:$0xff]
        %v333 = vld [vmem:[%s2 + $0xa0] sm:$0xff]
        %v334 = vld [vmem:[%s2 + $0xa8] sm:$0xff]
        %v335 = vld [vmem:[%s2 + $0xb0] sm:$0xff]
        %v336 = vld [vmem:[%s2 + $0xb8] sm:$0xff]
        %v337 = vld [vmem:[%s2 + $0xc0] sm:$0xff]
        %v338 = vld [vmem:[%s2 + $0xc8] sm:$0xff]
        %v339 = vld [vmem:[%s2 + $0xd0] sm:$0xff]
        %v340 = vld [vmem:[%s2 + $0xd8] sm:$0xff]
        %v341 = vld [vmem:[%s2 + $0xe0] sm:$0xff]
        %v342 = vld [vmem:[%s2 + $0xe8] sm:$0xff]
        %v343 = vld [vmem:[%s2 + $0xf0] sm:$0xff]
        %v344 = vld [vmem:[%s2 + $0xf8] sm:$0xff]
        %v345 = vld [vmem:[%s3] sm:$0xff]
        %v346 = vld [vmem:[%s3 + $0x8] sm:$0xff]
        %v347 = vld [vmem:[%s3 + $0x10] sm:$0xff]
        %v348 = vld [vmem:[%s3 + $0x18] sm:$0xff]
        %v349 = vld [vmem:[#allocation5] sm:$0xff]
        %v350 = vld [vmem:[#allocation5 + $0x8] sm:$0xff]
        %v351 = vld [vmem:[#allocation5 + $0x10] sm:$0xff]
        %v352 = vld [vmem:[#allocation5 + $0x18] sm:$0xff]
        %v353 = vld [vmem:[%s5] sm:$0x3]
        %v354 = vld [vmem:[%s1] sm:$0xff]
        %v355 = vld [vmem:[%s1 + $0x8] sm:$0xff]
        %v356 = vld [vmem:[%s1 + $0x10] sm:$0xff]
        %v357 = vld [vmem:[%s1 + $0x18] sm:$0xff]
        %v358 = vld [vmem:[%s1 + $0x20] sm:$0xff]
        %v359 = vld [vmem:[%s1 + $0x28] sm:$0xff]
        %v360 = vld [vmem:[%s1 + $0x30] sm:$0xff]
        %v361 = vld [vmem:[%s1 + $0x38] sm:$0xff]
        %v362 = vld [vmem:[%s1 + $0x40] sm:$0xff]
        %v363 = vld [vmem:[%s1 + $0x48] sm:$0xff]
        %v364 = vld [vmem:[%s1 + $0x50] sm:$0xff]
        %v365 = vld [vmem:[%s1 + $0x58] sm:$0xff]
        %v366 = vld [vmem:[%s1 + $0x60] sm:$0xff]
        %v367 = vld [vmem:[%s1 + $0x68] sm:$0xff]
        %v368 = vld [vmem:[%s1 + $0x70] sm:$0xff]
        %v369 = vld [vmem:[%s1 + $0x78] sm:$0xff]
        %v370 = vld [vmem:[%s1 + $0x80] sm:$0xff]
        %v371 = vld [vmem:[%s1 + $0x88] sm:$0xff]
        %v372 = vld [vmem:[%s1 + $0x90] sm:$0xff]
        %v373 = vld [vmem:[%s1 + $0x98] sm:$0xff]
        %v374 = vld [vmem:[%s1 + $0xa0] sm:$0xff]
        %v375 = vld [vmem:[%s1 + $0xa8] sm:$0xff]
        %v376 = vld [vmem:[%s1 + $0xb0] sm:$0xff]
        %v377 = vld [vmem:[%s1 + $0xb8] sm:$0xff]
        %v378 = vld [vmem:[%s1 + $0xc0] sm:$0xff]
        %v379 = vld [vmem:[%s1 + $0xc8] sm:$0xff]
        %v380 = vld [vmem:[%s1 + $0xd0] sm:$0xff]
        %v381 = vld [vmem:[%s1 + $0xd8] sm:$0xff]
        %v382 = vld [vmem:[%s1 + $0xe0] sm:$0xff]
        %v383 = vld [vmem:[%s1 + $0xe8] sm:$0xff]
        %v384 = vld [vmem:[%s1 + $0xf0] sm:$0xff]
        %v385 = vld [vmem:[%s1 + $0xf8] sm:$0xff]
        %386 = vmatprep.subr.mxu0 %v355
        %387 = vmatpush1.msra.mxu0 %v354
        %388 = vmatprep.subr.mxu0 %v357
        %389 = vmatpush1.msra.mxu0 %v356
        %390 = vmatprep.subr.mxu0 %v359
        %391 = vmatpush1.msra.mxu0 %v358
        %392 = vmatprep.subr.mxu0 %v361
        %393 = vmatpush1.msra.mxu0 %v360
        %394 = vmatprep.subr.mxu0 %v363
        %395 = vmatpush1.msra.mxu0 %v362
        %396 = vmatprep.subr.mxu0 %v365
        %397 = vmatpush1.msra.mxu0 %v364
        %398 = vmatprep.subr.mxu0 %v367
        %399 = vmatpush1.msra.mxu0 %v366
        %400 = vmatprep.subr.mxu0 %v369
        %401 = vmatpush1.msra.mxu0 %v368
        %402 = vmatprep.subr.mxu0 %v371
        %403 = vmatpush1.msra.mxu0 %v370
        %404 = vmatprep.subr.mxu0 %v373
        %405 = vmatpush1.msra.mxu0 %v372
        %406 = vmatprep.subr.mxu0 %v375
        %407 = vmatpush1.msra.mxu0 %v374
        %408 = vmatprep.subr.mxu0 %v377
        %409 = vmatpush1.msra.mxu0 %v376
        %410 = vmatprep.subr.mxu0 %v379
        %411 = vmatpush1.msra.mxu0 %v378
        %412 = vmatprep.subr.mxu0 %v381
        %413 = vmatpush1.msra.mxu0 %v380
        %414 = vmatprep.subr.mxu0 %v383
        %415 = vmatpush1.msra.mxu0 %v382
        %416 = vmatprep.subr.mxu0 %v385
        %417 = vmatpush1.msra.mxu0 %v384
        %418 = vmatprep.subr.mxu0 0.0
        %419 = vmatpush1.msra.mxu0 0.0
        %420 = vmatprep.subr.mxu0 0.0
        %421 = vmatpush1.msra.mxu0 0.0
        %422 = vmatprep.subr.mxu0 0.0
        %423 = vmatpush1.msra.mxu0 0.0
        %424 = vmatprep.subr.mxu0 0.0
        %425 = vmatpush1.msra.mxu0 0.0
        %426 = vmatprep.subr.mxu0 0.0
        %427 = vmatpush1.msra.mxu0 0.0
        %428 = vmatprep.subr.mxu0 0.0
        %429 = vmatpush1.msra.mxu0 0.0
        %430 = vmatprep.subr.mxu0 0.0
        %431 = vmatpush1.msra.mxu0 0.0
        %432 = vmatprep.subr.mxu0 0.0
        %433 = vmatpush1.msra.mxu0 0.0
        %434 = vmatprep.subr.mxu0 0.0
        %435 = vmatpush1.msra.mxu0 0.0
        %436 = vmatprep.subr.mxu0 0.0
        %437 = vmatpush1.msra.mxu0 0.0
        %438 = vmatprep.subr.mxu0 0.0
        %439 = vmatpush1.msra.mxu0 0.0
        %440 = vmatprep.subr.mxu0 0.0
        %441 = vmatpush1.msra.mxu0 0.0
        %442 = vmatprep.subr.mxu0 0.0
        %443 = vmatpush1.msra.mxu0 0.0
        %444 = vmatprep.subr.mxu0 0.0
        %445 = vmatpush1.msra.mxu0 0.0
        %446 = vmatprep.subr.mxu0 0.0
        %447 = vmatpush1.msra.mxu0 0.0
        %448 = vmatprep.subr.mxu0 0.0
        %449 = vmatpush1.msra.mxu0 0.0
        %450 = vmatprep.mubr.f32.mxu0 0.0
        %451 = vmatmul.mubr.f32.gmra.mrb[0].mxu0 %v305
        %v452 = vpop.f32.mrb[0].mxu0
        %v453 = vadd.f32 0.0, %v452
        %v454 = vpop.f32.mrb[0].mxu0
        %v455 = vadd.f32 0.0, %v454
        %456 = vmatprep.mubr.f32.mxu0 0.0
        %457 = vmatmul.mubr.f32.gmra.mrb[0].mxu0 %v306
        %v458 = vpop.f32.mrb[0].mxu0
        %v459 = vadd.f32 0.0, %v458
        %v460 = vpop.f32.mrb[0].mxu0
        %v461 = vadd.f32 0.0, %v460
        %462 = vmatprep.mubr.f32.mxu0 0.0
        %463 = vmatmul.mubr.f32.gmra.mrb[0].mxu0 %v307
        %v464 = vpop.f32.mrb[0].mxu0
        %v465 = vadd.f32 0.0, %v464
        %v466 = vpop.f32.mrb[0].mxu0
        %v467 = vadd.f32 0.0, %v466
        %468 = vmatprep.mubr.f32.mxu0 0.0
        %469 = vmatmul.mubr.f32.gmra.mrb[0].mxu0 %v308
        %v470 = vpop.f32.mrb[0].mxu0
        %v471 = vadd.f32 0.0, %v470
        %v472 = vpop.f32.mrb[0].mxu0
        %v473 = vadd.f32 0.0, %v472
        %474 = vmatprep.mubr.f32.mxu0 0.0
        %475 = vmatmul.mubr.f32.gmra.mrb[0].mxu0 %v309
        %v476 = vpop.f32.mrb[0].mxu0
        %v477 = vadd.f32 0.0, %v476
        %v478 = vpop.f32.mrb[0].mxu0
        %v479 = vadd.f32 0.0, %v478
        %480 = vmatprep.mubr.f32.mxu0 0.0
        %481 = vmatmul.mubr.f32.gmra.mrb[0].mxu0 %v310
        %v482 = vpop.f32.mrb[0].mxu0
        %v483 = vadd.f32 0.0, %v482
        %v484 = vpop.f32.mrb[0].mxu0
        %v485 = vadd.f32 0.0, %v484
        %486 = vmatprep.mubr.f32.mxu0 0.0
        %487 = vmatmul.mubr.f32.gmra.mrb[0].mxu0 %v311
        %v488 = vpop.f32.mrb[0].mxu0
        %v489 = vadd.f32 0.0, %v488
        %v490 = vpop.f32.mrb[0].mxu0
        %v491 = vadd.f32 0.0, %v490
        %492 = vmatprep.mubr.f32.mxu0 0.0
        %493 = vmatmul.mubr.f32.gmra.mrb[0].mxu0 %v312
        %v494 = vpop.f32.mrb[0].mxu0
        %v495 = vadd.f32 0.0, %v494
        %v496 = vpop.f32.mrb[0].mxu0
        %v497 = vadd.f32 0.0, %v496
        %498 = vdwg.mxu0
        %499 = vmatprep.subr.mxu0 0.0
        %500 = vmatpush1.msra.mxu0 %v313
        %501 = vmatprep.subr.mxu0 0.0
        %502 = vmatpush1.msra.mxu0 %v314
        %503 = vmatprep.subr.mxu0 0.0
        %504 = vmatpush1.msra.mxu0 %v315
        %505 = vmatprep.subr.mxu0 0.0
        %506 = vmatpush1.msra.mxu0 %v316
        %507 = vmatprep.subr.mxu0 0.0
        %508 = vmatpush1.msra.mxu0 %v317
        %509 = vmatprep.subr.mxu0 0.0
        %510 = vmatpush1.msra.mxu0 %v318
        %511 = vmatprep.subr.mxu0 0.0
        %512 = vmatpush1.msra.mxu0 %v319
        %513 = vmatprep.subr.mxu0 0.0
        %514 = vmatpush1.msra.mxu0 %v320
        %515 = vmatprep.subr.mxu0 0.0
        %516 = vmatpush1.msra.mxu0 %v321
        %517 = vmatprep.subr.mxu0 0.0
        %518 = vmatpush1.msra.mxu0 %v322
        %519 = vmatprep.subr.mxu0 0.0
        %520 = vmatpush1.msra.mxu0 %v323
        %521 = vmatprep.subr.mxu0 0.0
        %522 = vmatpush1.msra.mxu0 %v324
        %523 = vmatprep.subr.mxu0 0.0
        %524 = vmatpush1.msra.mxu0 %v325
        %525 = vmatprep.subr.mxu0 0.0
        %526 = vmatpush1.msra.mxu0 %v326
        %527 = vmatprep.subr.mxu0 0.0
        %528 = vmatpush1.msra.mxu0 %v327
        %529 = vmatprep.subr.mxu0 0.0
        %530 = vmatpush1.msra.mxu0 %v328
        %531 = vmatprep.subr.mxu0 0.0
        %532 = vmatpush1.msra.mxu0 %v329
        %533 = vmatprep.subr.mxu0 0.0
        %534 = vmatpush1.msra.mxu0 %v330
        %535 = vmatprep.subr.mxu0 0.0
        %536 = vmatpush1.msra.mxu0 %v331
        %537 = vmatprep.subr.mxu0 0.0
        %538 = vmatpush1.msra.mxu0 %v332
        %539 = vmatprep.subr.mxu0 0.0
        %540 = vmatpush1.msra.mxu0 %v333
        %541 = vmatprep.subr.mxu0 0.0
        %542 = vmatpush1.msra.mxu0 %v334
        %543 = vmatprep.subr.mxu0 0.0
        %544 = vmatpush1.msra.mxu0 %v335
        %545 = vmatprep.subr.mxu0 0.0
        %546 = vmatpush1.msra.mxu0 %v336
        %547 = vmatprep.subr.mxu0 0.0
        %548 = vmatpush1.msra.mxu0 %v337
        %549 = vmatprep.subr.mxu0 0.0
        %550 = vmatpush1.msra.mxu0 %v338
        %551 = vmatprep.subr.mxu0 0.0
        %552 = vmatpush1.msra.mxu0 %v339
        %553 = vmatprep.subr.mxu0 0.0
        %554 = vmatpush1.msra.mxu0 %v340
        %555 = vmatprep.subr.mxu0 0.0
        %556 = vmatpush1.msra.mxu0 %v341
        %557 = vmatprep.subr.mxu0 0.0
        %558 = vmatpush1.msra.mxu0 %v342
        %559 = vmatprep.subr.mxu0 0.0
        %560 = vmatpush1.msra.mxu0 %v343
        %561 = vmatprep.subr.mxu0 0.0
        %562 = vmatpush1.msra.mxu0 %v344
        %563 = vmatprep.mubr.f32.mxu0 %v455
        %564 = vmatmul.mubr.f32.gmra.mrb[0].mxu0 %v453
        %v565 = vpop.f32.mrb[0].mxu0
        %v566 = vadd.f32 0.0, %v565
        %v567 = vpop.f32.mrb[0].mxu0
        %568 = vmatprep.mubr.f32.mxu0 %v461
        %569 = vmatmul.mubr.f32.gmra.mrb[0].mxu0 %v459
        %v570 = vpop.f32.mrb[0].mxu0
        %v571 = vadd.f32 0.0, %v570
        %v572 = vpop.f32.mrb[0].mxu0
        %573 = vmatprep.mubr.f32.mxu0 %v467
        %574 = vmatmul.mubr.f32.gmra.mrb[0].mxu0 %v465
        %v575 = vpop.f32.mrb[0].mxu0
        %v576 = vadd.f32 0.0, %v575
        %v577 = vpop.f32.mrb[0].mxu0
        %578 = vmatprep.mubr.f32.mxu0 %v473
        %579 = vmatmul.mubr.f32.gmra.mrb[0].mxu0 %v471
        %v580 = vpop.f32.mrb[0].mxu0
        %v581 = vadd.f32 0.0, %v580
        %v582 = vpop.f32.mrb[0].mxu0
        %583 = vmatprep.mubr.f32.mxu0 %v479
        %584 = vmatmul.mubr.f32.gmra.mrb[0].mxu0 %v477
        %v585 = vpop.f32.mrb[0].mxu0
        %v586 = vadd.f32 0.0, %v585
        %v587 = vpop.f32.mrb[0].mxu0
        %588 = vmatprep.mubr.f32.mxu0 %v485
        %589 = vmatmul.mubr.f32.gmra.mrb[0].mxu0 %v483
        %v590 = vpop.f32.mrb[0].mxu0
        %v591 = vadd.f32 0.0, %v590
        %v592 = vpop.f32.mrb[0].mxu0
        %593 = vmatprep.mubr.f32.mxu0 %v491
        %594 = vmatmul.mubr.f32.gmra.mrb[0].mxu0 %v489
        %v595 = vpop.f32.mrb[0].mxu0
        %v596 = vadd.f32 0.0, %v595
        %v597 = vpop.f32.mrb[0].mxu0
        %598 = vmatprep.mubr.f32.mxu0 %v497
        %599 = vmatmul.mubr.f32.gmra.mrb[0].mxu0 %v495
        %v600 = vpop.f32.mrb[0].mxu0
        %v601 = vadd.f32 0.0, %v600
        %v602 = vpop.f32.mrb[0].mxu0
        %603 = vdwg.mxu0
        %vm604 = vcmask 130048
        %v606 = vsel %vm604, %v566, 0
        %v609 = vsel %vm604, %v571, 0
        %v612 = vsel %vm604, %v576, 0
        %v615 = vsel %vm604, %v581, 0
        %v618 = vsel %vm604, %v586, 0
        %v621 = vsel %vm604, %v591, 0
        %v624 = vsel %vm604, %v596, 0
        %v627 = vsel %vm604, %v601, 0
        %629 = vmatprep.subr.mxu0 %v346
        %630 = vmatpush1.msra.mxu0 %v345
        %631 = vmatprep.subr.mxu0 %v348
        %632 = vmatpush1.msra.mxu0 %v347
        %633 = vmatprep.subr.mxu0 0.0
        %634 = vmatpush1.msra.mxu0 0.0
        %635 = vmatprep.subr.mxu0 0.0
        %636 = vmatpush1.msra.mxu0 0.0
        %637 = vmatprep.subr.mxu0 0.0
        %638 = vmatpush1.msra.mxu0 0.0
        %639 = vmatprep.subr.mxu0 0.0
        %640 = vmatpush1.msra.mxu0 0.0
        %641 = vmatprep.subr.mxu0 0.0
        %642 = vmatpush1.msra.mxu0 0.0
        %643 = vmatprep.subr.mxu0 0.0
        %644 = vmatpush1.msra.mxu0 0.0
        %645 = vmatprep.subr.mxu0 0.0
        %646 = vmatpush1.msra.mxu0 0.0
        %647 = vmatprep.subr.mxu0 0.0
        %648 = vmatpush1.msra.mxu0 0.0
        %649 = vmatprep.subr.mxu0 0.0
        %650 = vmatpush1.msra.mxu0 0.0
        %651 = vmatprep.subr.mxu0 0.0
        %652 = vmatpush1.msra.mxu0 0.0
        %653 = vmatprep.subr.mxu0 0.0
        %654 = vmatpush1.msra.mxu0 0.0
        %655 = vmatprep.subr.mxu0 0.0
        %656 = vmatpush1.msra.mxu0 0.0
        %657 = vmatprep.subr.mxu0 0.0
        %658 = vmatpush1.msra.mxu0 0.0
        %659 = vmatprep.subr.mxu0 0.0
        %660 = vmatpush1.msra.mxu0 0.0
        %661 = vmatprep.subr.mxu0 0.0
        %662 = vmatpush1.msra.mxu0 0.0
        %663 = vmatprep.subr.mxu0 0.0
        %664 = vmatpush1.msra.mxu0 0.0
        %665 = vmatprep.subr.mxu0 0.0
        %666 = vmatpush1.msra.mxu0 0.0
        %667 = vmatprep.subr.mxu0 0.0
        %668 = vmatpush1.msra.mxu0 0.0
        %669 = vmatprep.subr.mxu0 0.0
        %670 = vmatpush1.msra.mxu0 0.0
        %671 = vmatprep.subr.mxu0 0.0
        %672 = vmatpush1.msra.mxu0 0.0
        %673 = vmatprep.subr.mxu0 0.0
        %674 = vmatpush1.msra.mxu0 0.0
        %675 = vmatprep.subr.mxu0 0.0
        %676 = vmatpush1.msra.mxu0 0.0
        %677 = vmatprep.subr.mxu0 0.0
        %678 = vmatpush1.msra.mxu0 0.0
        %679 = vmatprep.subr.mxu0 0.0
        %680 = vmatpush1.msra.mxu0 0.0
        %681 = vmatprep.subr.mxu0 0.0
        %682 = vmatpush1.msra.mxu0 0.0
        %683 = vmatprep.subr.mxu0 0.0
        %684 = vmatpush1.msra.mxu0 0.0
        %685 = vmatprep.subr.mxu0 0.0
        %686 = vmatpush1.msra.mxu0 0.0
        %687 = vmatprep.subr.mxu0 0.0
        %688 = vmatpush1.msra.mxu0 0.0
        %689 = vmatprep.subr.mxu0 0.0
        %690 = vmatpush1.msra.mxu0 0.0
        %691 = vmatprep.subr.mxu0 0.0
        %692 = vmatpush1.msra.mxu0 0.0
        %693 = vmatprep.mubr.f32.mxu0 0.0
        %694 = vmatmul.mubr.f32.gmra.mrb[0].mxu0 %v606
        %v695 = vpop.f32.mrb[0].mxu0
        %v696 = vadd.f32 0.0, %v695
        %v697 = vpop.f32.mrb[0].mxu0
        %v698 = vadd.f32 0.0, %v697
        %699 = vmatprep.mubr.f32.mxu0 0.0
        %700 = vmatmul.mubr.f32.gmra.mrb[0].mxu0 %v609
        %v701 = vpop.f32.mrb[0].mxu0
        %v702 = vadd.f32 0.0, %v701
        %v703 = vpop.f32.mrb[0].mxu0
        %v704 = vadd.f32 0.0, %v703
        %705 = vmatprep.mubr.f32.mxu0 0.0
        %706 = vmatmul.mubr.f32.gmra.mrb[0].mxu0 %v612
        %v707 = vpop.f32.mrb[0].mxu0
        %v708 = vadd.f32 0.0, %v707
        %v709 = vpop.f32.mrb[0].mxu0
        %v710 = vadd.f32 0.0, %v709
        %711 = vmatprep.mubr.f32.mxu0 0.0
        %712 = vmatmul.mubr.f32.gmra.mrb[0].mxu0 %v615
        %v713 = vpop.f32.mrb[0].mxu0
        %v714 = vadd.f32 0.0, %v713
        %v715 = vpop.f32.mrb[0].mxu0
        %v716 = vadd.f32 0.0, %v715
        %717 = vmatprep.mubr.f32.mxu0 0.0
        %718 = vmatmul.mubr.f32.gmra.mrb[0].mxu0 %v618
        %v719 = vpop.f32.mrb[0].mxu0
        %v720 = vadd.f32 0.0, %v719
        %v721 = vpop.f32.mrb[0].mxu0
        %v722 = vadd.f32 0.0, %v721
        %723 = vmatprep.mubr.f32.mxu0 0.0
        %724 = vmatmul.mubr.f32.gmra.mrb[0].mxu0 %v621
        %v725 = vpop.f32.mrb[0].mxu0
        %v726 = vadd.f32 0.0, %v725
        %v727 = vpop.f32.mrb[0].mxu0
        %v728 = vadd.f32 0.0, %v727
        %729 = vmatprep.mubr.f32.mxu0 0.0
        %730 = vmatmul.mubr.f32.gmra.mrb[0].mxu0 %v624
        %v731 = vpop.f32.mrb[0].mxu0
        %v732 = vadd.f32 0.0, %v731
        %v733 = vpop.f32.mrb[0].mxu0
        %v734 = vadd.f32 0.0, %v733
        %735 = vmatprep.mubr.f32.mxu0 0.0
        %736 = vmatmul.mubr.f32.gmra.mrb[0].mxu0 %v627
        %v737 = vpop.f32.mrb[0].mxu0
        %v738 = vadd.f32 0.0, %v737
        %v739 = vpop.f32.mrb[0].mxu0
        %v740 = vadd.f32 0.0, %v739
        %741 = vdwg.mxu0
        %v742 = vsub.f32 %v453, %v696
        %v743 = vsub.f32 %v455, %v698
        %v744 = vsub.f32 %v459, %v702
        %v745 = vsub.f32 %v461, %v704
        %v746 = vsub.f32 %v465, %v708
        %v747 = vsub.f32 %v467, %v710
        %v748 = vsub.f32 %v471, %v714
        %v749 = vsub.f32 %v473, %v716
        %v750 = vsub.f32 %v477, %v720
        %v751 = vsub.f32 %v479, %v722
        %v752 = vsub.f32 %v483, %v726
        %v753 = vsub.f32 %v485, %v728
        %v754 = vsub.f32 %v489, %v732
        %v755 = vsub.f32 %v491, %v734
        %v756 = vsub.f32 %v495, %v738
        %v757 = vsub.f32 %v497, %v740
        %v758 = vmul.f32 %v742, %v742
        %v759 = vmul.f32 %v743, %v743
        %v760 = vmul.f32 %v744, %v744
        %v761 = vmul.f32 %v745, %v745
        %v762 = vmul.f32 %v746, %v746
        %v763 = vmul.f32 %v747, %v747
        %v764 = vmul.f32 %v748, %v748
        %v765 = vmul.f32 %v749, %v749
        %v766 = vmul.f32 %v750, %v750
        %v767 = vmul.f32 %v751, %v751
        %v768 = vmul.f32 %v752, %v752
        %v769 = vmul.f32 %v753, %v753
        %v770 = vmul.f32 %v754, %v754
        %v771 = vmul.f32 %v755, %v755
        %v772 = vmul.f32 %v756, %v756
        %v773 = vmul.f32 %v757, %v757
        %774 = vmatprep.subr.mxu0 0.0
        %775 = vmatpush1.msra.mxu0 %v313
        %776 = vmatprep.subr.mxu0 0.0
        %777 = vmatpush1.msra.mxu0 %v314
        %778 = vmatprep.subr.mxu0 0.0
        %779 = vmatpush1.msra.mxu0 %v315
        %780 = vmatprep.subr.mxu0 0.0
        %781 = vmatpush1.msra.mxu0 %v316
        %782 = vmatprep.subr.mxu0 0.0
        %783 = vmatpush1.msra.mxu0 %v317
        %784 = vmatprep.subr.mxu0 0.0
        %785 = vmatpush1.msra.mxu0 %v318
        %786 = vmatprep.subr.mxu0 0.0
        %787 = vmatpush1.msra.mxu0 %v319
        %788 = vmatprep.subr.mxu0 0.0
        %789 = vmatpush1.msra.mxu0 %v320
        %790 = vmatprep.subr.mxu0 0.0
        %791 = vmatpush1.msra.mxu0 %v321
        %792 = vmatprep.subr.mxu0 0.0
        %793 = vmatpush1.msra.mxu0 %v322
        %794 = vmatprep.subr.mxu0 0.0
        %795 = vmatpush1.msra.mxu0 %v323
        %796 = vmatprep.subr.mxu0 0.0
        %797 = vmatpush1.msra.mxu0 %v324
        %798 = vmatprep.subr.mxu0 0.0
        %799 = vmatpush1.msra.mxu0 %v325
        %800 = vmatprep.subr.mxu0 0.0
        %801 = vmatpush1.msra.mxu0 %v326
        %802 = vmatprep.subr.mxu0 0.0
        %803 = vmatpush1.msra.mxu0 %v327
        %804 = vmatprep.subr.mxu0 0.0
        %805 = vmatpush1.msra.mxu0 %v328
        %806 = vmatprep.subr.mxu0 0.0
        %807 = vmatpush1.msra.mxu0 %v329
        %808 = vmatprep.subr.mxu0 0.0
        %809 = vmatpush1.msra.mxu0 %v330
        %810 = vmatprep.subr.mxu0 0.0
        %811 = vmatpush1.msra.mxu0 %v331
        %812 = vmatprep.subr.mxu0 0.0
        %813 = vmatpush1.msra.mxu0 %v332
        %814 = vmatprep.subr.mxu0 0.0
        %815 = vmatpush1.msra.mxu0 %v333
        %816 = vmatprep.subr.mxu0 0.0
        %817 = vmatpush1.msra.mxu0 %v334
        %818 = vmatprep.subr.mxu0 0.0
        %819 = vmatpush1.msra.mxu0 %v335
        %820 = vmatprep.subr.mxu0 0.0
        %821 = vmatpush1.msra.mxu0 %v336
        %822 = vmatprep.subr.mxu0 0.0
        %823 = vmatpush1.msra.mxu0 %v337
        %824 = vmatprep.subr.mxu0 0.0
        %825 = vmatpush1.msra.mxu0 %v338
        %826 = vmatprep.subr.mxu0 0.0
        %827 = vmatpush1.msra.mxu0 %v339
        %828 = vmatprep.subr.mxu0 0.0
        %829 = vmatpush1.msra.mxu0 %v340
        %830 = vmatprep.subr.mxu0 0.0
        %831 = vmatpush1.msra.mxu0 %v341
        %832 = vmatprep.subr.mxu0 0.0
        %833 = vmatpush1.msra.mxu0 %v342
        %834 = vmatprep.subr.mxu0 0.0
        %835 = vmatpush1.msra.mxu0 %v343
        %836 = vmatprep.subr.mxu0 0.0
        %837 = vmatpush1.msra.mxu0 %v344
        %838 = vmatprep.mubr.f32.mxu0 %v759
        %839 = vmatmul.mubr.f32.gmra.mrb[0].mxu0 %v758
        %v840 = vpop.f32.mrb[0].mxu0
        %v841 = vadd.f32 1e-05, %v840
        %v842 = vpop.f32.mrb[0].mxu0
        %843 = vmatprep.mubr.f32.mxu0 %v761
        %844 = vmatmul.mubr.f32.gmra.mrb[0].mxu0 %v760
        %v845 = vpop.f32.mrb[0].mxu0
        %v846 = vadd.f32 1e-05, %v845
        %v847 = vpop.f32.mrb[0].mxu0
        %848 = vmatprep.mubr.f32.mxu0 %v763
        %849 = vmatmul.mubr.f32.gmra.mrb[0].mxu0 %v762
        %v850 = vpop.f32.mrb[0].mxu0
        %v851 = vadd.f32 1e-05, %v850
        %v852 = vpop.f32.mrb[0].mxu0
        %853 = vmatprep.mubr.f32.mxu0 %v765
        %854 = vmatmul.mubr.f32.gmra.mrb[0].mxu0 %v764
        %v855 = vpop.f32.mrb[0].mxu0
        %v856 = vadd.f32 1e-05, %v855
        %v857 = vpop.f32.mrb[0].mxu0
        %858 = vmatprep.mubr.f32.mxu0 %v767
        %859 = vmatmul.mubr.f32.gmra.mrb[0].mxu0 %v766
        %v860 = vpop.f32.mrb[0].mxu0
        %v861 = vadd.f32 1e-05, %v860
        %v862 = vpop.f32.mrb[0].mxu0
        %863 = vmatprep.mubr.f32.mxu0 %v769
        %864 = vmatmul.mubr.f32.gmra.mrb[0].mxu0 %v768
        %v865 = vpop.f32.mrb[0].mxu0
        %v866 = vadd.f32 1e-05, %v865
        %v867 = vpop.f32.mrb[0].mxu0
        %868 = vmatprep.mubr.f32.mxu0 %v771
        %869 = vmatmul.mubr.f32.gmra.mrb[0].mxu0 %v770
        %v870 = vpop.f32.mrb[0].mxu0
        %v871 = vadd.f32 1e-05, %v870
        %v872 = vpop.f32.mrb[0].mxu0
        %873 = vmatprep.mubr.f32.mxu0 %v773
        %874 = vmatmul.mubr.f32.gmra.mrb[0].mxu0 %v772
        %v875 = vpop.f32.mrb[0].mxu0
        %v876 = vadd.f32 1e-05, %v875
        %v877 = vpop.f32.mrb[0].mxu0
        %878 = vdwg.mxu0
        %v879 = vrsqrt.pop %v841
        %v880 = vrsqrt.pop %v846
        %v881 = vrsqrt.pop %v851
        %v882 = vrsqrt.pop %v856
        %v883 = vrsqrt.pop %v861
        %v884 = vrsqrt.pop %v866
        %v885 = vrsqrt.pop %v871
        %v886 = vrsqrt.pop %v876
        %v888 = vsel %vm604, %v879, 0
        %v891 = vsel %vm604, %v880, 0
        %v894 = vsel %vm604, %v881, 0
        %v897 = vsel %vm604, %v882, 0
        %v900 = vsel %vm604, %v883, 0
        %v903 = vsel %vm604, %v884, 0
        %v906 = vsel %vm604, %v885, 0
        %v909 = vsel %vm604, %v886, 0
        %911 = vmatprep.subr.mxu0 %v350
        %912 = vmatpush1.msra.mxu0 %v349
        %913 = vmatprep.subr.mxu0 %v352
        %914 = vmatpush1.msra.mxu0 %v351
        %915 = vmatprep.subr.mxu0 0.0
        %916 = vmatpush1.msra.mxu0 0.0
        %917 = vmatprep.subr.mxu0 0.0
        %918 = vmatpush1.msra.mxu0 0.0
        %919 = vmatprep.subr.mxu0 0.0
        %920 = vmatpush1.msra.mxu0 0.0
        %921 = vmatprep.subr.mxu0 0.0
        %922 = vmatpush1.msra.mxu0 0.0
        %923 = vmatprep.subr.mxu0 0.0
        %924 = vmatpush1.msra.mxu0 0.0
        %925 = vmatprep.subr.mxu0 0.0
        %926 = vmatpush1.msra.mxu0 0.0
        %927 = vmatprep.subr.mxu0 0.0
        %928 = vmatpush1.msra.mxu0 0.0
        %929 = vmatprep.subr.mxu0 0.0
        %930 = vmatpush1.msra.mxu0 0.0
        %931 = vmatprep.subr.mxu0 0.0
        %932 = vmatpush1.msra.mxu0 0.0
        %933 = vmatprep.subr.mxu0 0.0
        %934 = vmatpush1.msra.mxu0 0.0
        %935 = vmatprep.subr.mxu0 0.0
        %936 = vmatpush1.msra.mxu0 0.0
        %937 = vmatprep.subr.mxu0 0.0
        %938 = vmatpush1.msra.mxu0 0.0
        %939 = vmatprep.subr.mxu0 0.0
        %940 = vmatpush1.msra.mxu0 0.0
        %941 = vmatprep.subr.mxu0 0.0
        %942 = vmatpush1.msra.mxu0 0.0
        %943 = vmatprep.subr.mxu0 0.0
        %944 = vmatpush1.msra.mxu0 0.0
        %945 = vmatprep.subr.mxu0 0.0
        %946 = vmatpush1.msra.mxu0 0.0
        %947 = vmatprep.subr.mxu0 0.0
        %948 = vmatpush1.msra.mxu0 0.0
        %949 = vmatprep.subr.mxu0 0.0
        %950 = vmatpush1.msra.mxu0 0.0
        %951 = vmatprep.subr.mxu0 0.0
        %952 = vmatpush1.msra.mxu0 0.0
        %953 = vmatprep.subr.mxu0 0.0
        %954 = vmatpush1.msra.mxu0 0.0
        %955 = vmatprep.subr.mxu0 0.0
        %956 = vmatpush1.msra.mxu0 0.0
        %957 = vmatprep.subr.mxu0 0.0
        %958 = vmatpush1.msra.mxu0 0.0
        %959 = vmatprep.subr.mxu0 0.0
        %960 = vmatpush1.msra.mxu0 0.0
        %961 = vmatprep.subr.mxu0 0.0
        %962 = vmatpush1.msra.mxu0 0.0
        %963 = vmatprep.subr.mxu0 0.0
        %964 = vmatpush1.msra.mxu0 0.0
        %965 = vmatprep.subr.mxu0 0.0
        %966 = vmatpush1.msra.mxu0 0.0
        %967 = vmatprep.subr.mxu0 0.0
        %968 = vmatpush1.msra.mxu0 0.0
        %969 = vmatprep.subr.mxu0 0.0
        %970 = vmatpush1.msra.mxu0 0.0
        %971 = vmatprep.subr.mxu0 0.0
        %972 = vmatpush1.msra.mxu0 0.0
        %973 = vmatprep.subr.mxu0 0.0
        %974 = vmatpush1.msra.mxu0 0.0
        %975 = vmatprep.mubr.f32.mxu0 0.0
        %976 = vmatmul.mubr.f32.gmra.mrb[0].mxu0 %v888
        %v977 = vpop.f32.mrb[0].mxu0
        %v978 = vadd.f32 0.0, %v977
        %v979 = vpop.f32.mrb[0].mxu0
        %v980 = vadd.f32 0.0, %v979
        %981 = vmatprep.mubr.f32.mxu0 0.0
        %982 = vmatmul.mubr.f32.gmra.mrb[0].mxu0 %v891
        %v983 = vpop.f32.mrb[0].mxu0
        %v984 = vadd.f32 0.0, %v983
        %v985 = vpop.f32.mrb[0].mxu0
        %v986 = vadd.f32 0.0, %v985
        %987 = vmatprep.mubr.f32.mxu0 0.0
        %988 = vmatmul.mubr.f32.gmra.mrb[0].mxu0 %v894
        %v989 = vpop.f32.mrb[0].mxu0
        %v990 = vadd.f32 0.0, %v989
        %v991 = vpop.f32.mrb[0].mxu0
        %v992 = vadd.f32 0.0, %v991
        %993 = vmatprep.mubr.f32.mxu0 0.0
        %994 = vmatmul.mubr.f32.gmra.mrb[0].mxu0 %v897
        %v995 = vpop.f32.mrb[0].mxu0
        %v996 = vadd.f32 0.0, %v995
        %v997 = vpop.f32.mrb[0].mxu0
        %v998 = vadd.f32 0.0, %v997
        %999 = vmatprep.mubr.f32.mxu0 0.0
        %1000 = vmatmul.mubr.f32.gmra.mrb[0].mxu0 %v900
        %v1001 = vpop.f32.mrb[0].mxu0
        %v1002 = vadd.f32 0.0, %v1001
        %v1003 = vpop.f32.mrb[0].mxu0
        %v1004 = vadd.f32 0.0, %v1003
        %1005 = vmatprep.mubr.f32.mxu0 0.0
        %1006 = vmatmul.mubr.f32.gmra.mrb[0].mxu0 %v903
        %v1007 = vpop.f32.mrb[0].mxu0
        %v1008 = vadd.f32 0.0, %v1007
        %v1009 = vpop.f32.mrb[0].mxu0
        %v1010 = vadd.f32 0.0, %v1009
        %1011 = vmatprep.mubr.f32.mxu0 0.0
        %1012 = vmatmul.mubr.f32.gmra.mrb[0].mxu0 %v906
        %v1013 = vpop.f32.mrb[0].mxu0
        %v1014 = vadd.f32 0.0, %v1013
        %v1015 = vpop.f32.mrb[0].mxu0
        %v1016 = vadd.f32 0.0, %v1015
        %1017 = vmatprep.mubr.f32.mxu0 0.0
        %1018 = vmatmul.mubr.f32.gmra.mrb[0].mxu0 %v909
        %v1019 = vpop.f32.mrb[0].mxu0
        %v1020 = vadd.f32 0.0, %v1019
        %v1021 = vpop.f32.mrb[0].mxu0
        %v1022 = vadd.f32 0.0, %v1021
        %1023 = vdwg.mxu0
        %v1024 = vmul.f32 %v742, %v978
        %v1025 = vmul.f32 %v743, %v980
        %v1026 = vmul.f32 %v744, %v984
        %v1027 = vmul.f32 %v745, %v986
        %v1028 = vmul.f32 %v746, %v990
        %v1029 = vmul.f32 %v747, %v992
        %v1030 = vmul.f32 %v748, %v996
        %v1031 = vmul.f32 %v749, %v998
        %v1032 = vmul.f32 %v750, %v1002
        %v1033 = vmul.f32 %v751, %v1004
        %v1034 = vmul.f32 %v752, %v1008
        %v1035 = vmul.f32 %v753, %v1010
        %v1036 = vmul.f32 %v754, %v1014
        %v1037 = vmul.f32 %v755, %v1016
        %v1038 = vmul.f32 %v756, %v1020
        %v1039 = vmul.f32 %v757, %v1022
        %v1041 = vlaneseq
        %v1042 = vshrl.u32 %v1041, 7
        %v1043 = vsub.s32 0, %v1042
        %v1044 = vrot.slane %v353, %v1043
        %v1045 = vlaneseq
        %v1046 = vshrl.u32 %v1045, 7
        %v1047 = vsub.s32 1, %v1046
        %v1048 = vrot.slane %v353, %v1047
        %v1051 = vadd.f32 %v1024, %v1044
        %v1052 = vadd.f32 %v1025, %v1048
        %v1053 = vadd.f32 %v1026, %v1044
        %v1054 = vadd.f32 %v1027, %v1048
        %v1055 = vadd.f32 %v1028, %v1044
        %v1056 = vadd.f32 %v1029, %v1048
        %v1057 = vadd.f32 %v1030, %v1044
        %v1058 = vadd.f32 %v1031, %v1048
        %v1059 = vadd.f32 %v1032, %v1044
        %v1060 = vadd.f32 %v1033, %v1048
        %v1061 = vadd.f32 %v1034, %v1044
        %v1062 = vadd.f32 %v1035, %v1048
        %v1063 = vadd.f32 %v1036, %v1044
        %v1064 = vadd.f32 %v1037, %v1048
        %v1065 = vadd.f32 %v1038, %v1044
        %v1066 = vadd.f32 %v1039, %v1048
        %v1075 = vcombine.high %v1051, %v1051
        %v1076 = vcombine.high %v1053, %v1053
        %v1077 = vcombine.high %v1055, %v1055
        %v1078 = vcombine.high %v1057, %v1057
        %v1079 = vcombine.high %v1059, %v1059
        %v1080 = vcombine.high %v1061, %v1061
        %v1081 = vcombine.high %v1063, %v1063
        %v1082 = vcombine.high %v1065, %v1065
        %1091 = vst [vmem:[%s302] sm:$0xf] %v1051
        %1092 = vst [vmem:[%s302 + $0x8] sm:$0xf] %v1075
        %1093 = vst [vmem:[%s302 + $0x10] sm:$0xf] %v1053
        %1094 = vst [vmem:[%s302 + $0x18] sm:$0xf] %v1076
        %1095 = vst [vmem:[%s302 + $0x20] sm:$0xf] %v1055
        %1096 = vst [vmem:[%s302 + $0x28] sm:$0xf] %v1077
        %1097 = vst [vmem:[%s302 + $0x30] sm:$0xf] %v1057
        %1098 = vst [vmem:[%s302 + $0x38] sm:$0xf] %v1078
        %1099 = vst [vmem:[%s302 + $0x40] sm:$0xf] %v1059
        %1100 = vst [vmem:[%s302 + $0x48] sm:$0xf] %v1079
        %1101 = vst [vmem:[%s302 + $0x50] sm:$0xf] %v1061
        %1102 = vst [vmem:[%s302 + $0x58] sm:$0xf] %v1080
        %1103 = vst [vmem:[%s302 + $0x60] sm:$0xf] %v1063
        %1104 = vst [vmem:[%s302 + $0x68] sm:$0xf] %v1081
        %1105 = vst [vmem:[%s302 + $0x70] sm:$0xf] %v1065
        %1106 = vst [vmem:[%s302 + $0x78] sm:$0xf] %v1082
        %v1115 = vcombine.high %v1052, %v1052
        %v1116 = vcombine.high %v1054, %v1054
        %v1117 = vcombine.high %v1056, %v1056
        %v1118 = vcombine.high %v1058, %v1058
        %v1119 = vcombine.high %v1060, %v1060
        %v1120 = vcombine.high %v1062, %v1062
        %v1121 = vcombine.high %v1064, %v1064
        %v1122 = vcombine.high %v1066, %v1066
        %s1131 = scalar_lea.vmem %s302, 4 [#allocation7]
        %1132 = vst [vmem:[%s1131] sm:$0xf] %v1052
        %1133 = vst [vmem:[%s1131 + $0x8] sm:$0xf] %v1115
        %1134 = vst [vmem:[%s1131 + $0x10] sm:$0xf] %v1054
        %1135 = vst [vmem:[%s1131 + $0x18] sm:$0xf] %v1116
        %1136 = vst [vmem:[%s1131 + $0x20] sm:$0xf] %v1056
        %1137 = vst [vmem:[%s1131 + $0x28] sm:$0xf] %v1117
        %1138 = vst [vmem:[%s1131 + $0x30] sm:$0xf] %v1058
        %1139 = vst [vmem:[%s1131 + $0x38] sm:$0xf] %v1118
        %1140 = vst [vmem:[%s1131 + $0x40] sm:$0xf] %v1060
        %1141 = vst [vmem:[%s1131 + $0x48] sm:$0xf] %v1119
        %1142 = vst [vmem:[%s1131 + $0x50] sm:$0xf] %v1062
        %1143 = vst [vmem:[%s1131 + $0x58] sm:$0xf] %v1120
        %1144 = vst [vmem:[%s1131 + $0x60] sm:$0xf] %v1064
        %1145 = vst [vmem:[%s1131 + $0x68] sm:$0xf] %v1121
        %1146 = vst [vmem:[%s1131 + $0x70] sm:$0xf] %v1066
        %1147 = vst [vmem:[%s1131 + $0x78] sm:$0xf] %v1122
        %s1148 = sand.u32 %s179, 1
        %s1149 = scalar_lea.sflag [#allocation4], %s1148
        %s1150 = sand.u32 %s179, 1
        %s1151 = smul.addr %s1150, 128
        %s1152 = scalar_lea.vmem [#allocation7], %s1151
        // Predicated region
        $region53: #{tpu_custom_call.1} parent=43 // pred_check
          %p1153 = pneg %p189
        $region54: #{tpu_custom_call.1} parent=43 // pred_check_branch
          %1155 = sbr.rel (%p1153) target = $region56
        $region55: #{tpu_custom_call.1} parent=43 // pred_region
          %s1156 = smul.u32 16, %s29
          %s1158 = ssub.s32 2048, 2048
          %1159 = vsyncadd %s1149, %s1158
          %s1160 = smul.addr %s1156, 2
          %s1161 = smul.addr %s28, 32
          %s1162 = sadd.s32 %s1160, %s1161
          %s1163 = smul.addr %s1162, 64
          %s1164 = scalar_lea.hbm %s6, %s1163
          %s1165 = sshll.u32 %s1152, 4
          %s1166 = int_to_ptr.vmem [resolvable:$true] %s1165
          %1171 = dma.vmem_to_hbm [thread:$0]  %s1166, 2048, %s1164, %s1149, 64, 64, 4
        $region56: #{tpu_custom_call.1} parent=43 // pred_fallthru
          _
      $region44: #{tpu_custom_call.1} parent=5 // pred_fallthru
        _
      %p1172 = scmp.le.s32.totalorder 2, %s19
      // Predicated region
      $region57: #{tpu_custom_call.1} parent=5 // pred_check
        %p1173 = pneg %p1172
      $region58: #{tpu_custom_call.1} parent=5 // pred_check_branch
        %1175 = sbr.rel (%p1173) target = $region60
      $region59: #{tpu_custom_call.1} parent=5 // pred_region
        %s1176 = ssub.s32 %s19, 2
        // Predicated region
        $region61: #{tpu_custom_call.1} parent=59 // pred_check
          %p1177 = pneg %p195
        $region62: #{tpu_custom_call.1} parent=59 // pred_check_branch
          %1179 = sbr.rel (%p1177) target = $region64
        $region63: #{tpu_custom_call.1} parent=59 // pred_region
          %s1180 = sand.u32 %s180, 1
          %s1181 = scalar_lea.sflag [#allocation4], %s1180
          %s1182 = sand.u32 %s180, 1
          %s1183 = smul.addr %s1182, 128
          %s1184 = scalar_lea.vmem [#allocation7], %s1183
          %1185 = dma.done %s1181, 2048
        $region64: #{tpu_custom_call.1} parent=59 // pred_fallthru
          _
      $region60: #{tpu_custom_call.1} parent=5 // pred_fallthru
        _
    $region6: #{tpu_custom_call.1} parent=1 // loop_footer
      %s23 = sadd.s32 1, %s19
    $region7: #{tpu_custom_call.1} parent=1 // loop_footer_branch
      %18 = sbr.rel target = $region3
    $region8: #{tpu_custom_call.1} parent=1 // loop_exit
      _
    %1186 = vsyncpa [#allocation3], 1
    %s1187 = scalar_lea.sflag [#allocation3], 1
    %1188 = vsyncpa %s1187, 1
    %1189 = vsyncpa [#allocation6], 1
    %1190 = vsyncpa [#allocation4], 1
    %s1191 = scalar_lea.sflag [#allocation4], 1
    %1192 = vsyncpa %s1191, 1

</llo_original>
